<compile_context>
chip_gen: v7x
topology: tpu7x:2x2x1
jax: 0.10.0
libtpu: 0.0.40
codegen_flags: <defaults>
</compile_context>

<pallas_src>
import math

import jax
import jax.numpy as jnp
from jax import lax
from jax.experimental import pallas as pl
from jax.experimental.pallas import tpu as pltpu


# ----------------------------- Pallas kernel -------------------------------

def _disc_kernel(flat_ref, lbl_ref, t_ref,
                 w1_ref, b1_ref,
                 w2_ref, b2_ref,
                 w3_ref, b3_ref,
                 w4_ref, b4_ref,
                 w5_ref, b5_ref,
                 o_ref):
    """4x (Linear + LeakyReLU(0.2)) + Linear + Sigmoid, with the embedding
    lookup fused in as a one-hot matmul against the precomputed (E @ W1b)."""
    x = flat_ref[...]                                   # (TM, 200) bf16
    tm = x.shape[0]
    ncls = t_ref.shape[0]                               # padded class dim (16)

    # Fused nn.Embedding lookup + concat: one_hot(labels) @ (E @ W1b).
    classes = lax.broadcasted_iota(jnp.int32, (tm, ncls), 1)
    onehot = (lbl_ref[...] == classes).astype(jnp.bfloat16)   # (TM, 16)

    # Layer 1 (split over the former concat axis), f32 accumulate.
    h = jnp.dot(x, w1_ref[...], preferred_element_type=jnp.float32)
    h = h + jnp.dot(onehot, t_ref[...], preferred_element_type=jnp.float32)
    h = h + b1_ref[...]
    h = jnp.maximum(h, 0.2 * h)                         # LeakyReLU(0.2)

    def lin_lrelu(h, w_ref, b_ref):
        y = jnp.dot(h.astype(jnp.bfloat16), w_ref[...],
                    preferred_element_type=jnp.float32) + b_ref[...]
        return jnp.maximum(y, 0.2 * y)

    h = lin_lrelu(h, w2_ref, b2_ref)                    # (TM, 256)
    h = lin_lrelu(h, w3_ref, b3_ref)                    # (TM, 128)
    h = lin_lrelu(h, w4_ref, b4_ref)                    # (TM, 64)

    # Final 64 -> 1: VPU broadcast-mul + XLU lane reduce (skip 1-column MXU op).
    y = jnp.sum(h * w5_ref[...], axis=-1, keepdims=True) + b5_ref[0]
    # Sigmoid: exp on EUP, approximate reciprocal on EUP.
    o_ref[...] = pl.reciprocal(1.0 + jnp.exp(-y), approx=True)


def _round_up(x, m):
    return ((x + m - 1) // m) * m


def _disc_pallas(flat, lbl, p, tm, n_pad):
    d_in = flat.shape[1]
    grid = (n_pad // tm,)

    def resident(a):
        return pl.BlockSpec(a.shape, lambda i: (0, 0))   # weights stay in VMEM

    in_specs = [
        pl.BlockSpec((tm, d_in), lambda i: (i, 0)),      # flat rows
        pl.BlockSpec((tm, 1), lambda i: (i, 0)),         # labels
        resident(p["t"]),
        resident(p["w1a"]), resident(p["b1"]),
        resident(p["w2"]), resident(p["b2"]),
        resident(p["w3"]), resident(p["b3"]),
        resident(p["w4"]), resident(p["b4"]),
        resident(p["w5"]),
        pl.BlockSpec(memory_space=pltpu.MemorySpace.SMEM),   # b5 scalar
    ]

    return pl.pallas_call(
        _disc_kernel,
        out_shape=jax.ShapeDtypeStruct((n_pad, 1), jnp.float32),
        grid=grid,
        in_specs=in_specs,
        out_specs=pl.BlockSpec((tm, 1), lambda i: (i, 0)),
        compiler_params=pltpu.CompilerParams(
            dimension_semantics=("parallel",)),
    )(flat, lbl, p["t"], p["w1a"], p["b1"], p["w2"], p["b2"],
      p["w3"], p["b3"], p["w4"], p["b4"], p["w5"], p["b5"])


# ------------------------- Parameter construction --------------------------

def init_discriminator_params(key, input_size=200, channels=1, num_classes=10):
    """Matches the module's _initialize_weights(): kaiming_normal_(weight)*0.1,
    bias = 0. Embedding ~ N(0, 1). Weights stored (in, out) = PyTorch.T."""
    in_dim = channels * input_size + num_classes
    dims = [in_dim, 256, 256, 128, 64, 1]

    keys = jax.random.split(key, len(dims))
    emb_key, lin_keys = keys[0], keys[1:]

    embedding = jax.random.normal(emb_key, (num_classes, num_classes),
                                  dtype=jnp.float32)

    params = []
    for i in range(5):
        fan_in, fan_out = dims[i], dims[i + 1]
        std = math.sqrt(2.0 / fan_in)
        w = jax.random.normal(lin_keys[i], (fan_in, fan_out),
                              dtype=jnp.float32) * std * 0.1
        b = jnp.zeros((1, fan_out), dtype=jnp.float32)
        params.append((w, b))
    return embedding, params


def prepare_params(embedding, params, num_classes=10, class_pad=16):
    """Kernel-ready parameter pack: bf16 matmul weights, split first layer,
    precomputed (E @ W1b) label table, (1, 64) final row + scalar bias."""
    (w1, b1), (w2, b2), (w3, b3), (w4, b4), (w5, b5) = params
    flat_dim = w1.shape[0] - num_classes
    w1a = w1[:flat_dim].astype(jnp.bfloat16)             # (200, 256)
    w1b = w1[flat_dim:]                                  # (10, 256) f32
    t = embedding @ w1b                                  # (10, 256) f32
    t = jnp.pad(t, ((0, class_pad - num_classes), (0, 0))).astype(jnp.bfloat16)
    return dict(
        t=t,
        w1a=w1a, b1=b1.astype(jnp.float32),
        w2=w2.astype(jnp.bfloat16), b2=b2.astype(jnp.float32),
        w3=w3.astype(jnp.bfloat16), b3=b3.astype(jnp.float32),
        w4=w4.astype(jnp.bfloat16), b4=b4.astype(jnp.float32),
        w5=w5.reshape(1, -1).astype(jnp.float32),        # (1, 64) f32 (VPU path)
        b5=b5.reshape(-1).astype(jnp.float32),           # (1,)  scalar (SMEM)
    )


def discriminator_forward(inputs, labels, prep):
    """inputs: (N, C, L) (or any (N, ...)); labels: (N,) int."""
    n = inputs.shape[0]
    flat = inputs.reshape(n, -1).astype(jnp.bfloat16)    # torch.flatten(inputs, 1)
    lbl = labels.reshape(n, 1).astype(jnp.int32)

    tm = min(256, _round_up(n, 8))
    n_pad = _round_up(n, tm)
    if n_pad != n:
        flat = jnp.pad(flat, ((0, n_pad - n), (0, 0)))
        lbl = jnp.pad(lbl, ((0, n_pad - n), (0, 0)))

    out = _disc_pallas(flat, lbl, prep, tm, n_pad)
    return out[:n]


# --------------------------------- main -------------------------------------

if __name__ == "__main__":
    INPUT_SIZE = 200
    CHANNELS = 1
    NUM_CLASSES = 10
    BATCH = 8

    key = jax.random.PRNGKey(0)
    k_param, k_x, k_lbl = jax.random.split(key, 3)

    embedding, params = init_discriminator_params(
        k_param, input_size=INPUT_SIZE, channels=CHANNELS,
        num_classes=NUM_CLASSES)
    prep = prepare_params(embedding, params, num_classes=NUM_CLASSES)

    inputs = jax.random.normal(k_x, (BATCH, CHANNELS, INPUT_SIZE),
                               dtype=jnp.float32)
    labels = jax.random.randint(k_lbl, (BATCH,), 0, NUM_CLASSES,
                                dtype=jnp.int32)

    out = discriminator_forward(inputs, labels, prep)
    out = jax.block_until_ready(out)
    assert out.shape == (BATCH, 1), out.shape

    # Reference 1: pure JAX, mimicking the kernel's bf16 operand casts (tight).
    def ref_bf16(x, lbl):
        f32, bf16 = jnp.float32, jnp.bfloat16
        flat = x.reshape(x.shape[0], -1).astype(bf16).astype(f32)
        onehot = jax.nn.one_hot(lbl, prep["t"].shape[0], dtype=f32)
        h = (flat @ prep["w1a"].astype(f32)
             + onehot @ prep["t"].astype(f32) + prep["b1"])
        h = jnp.maximum(h, 0.2 * h)
        for w, b in ((prep["w2"], prep["b2"]),
                     (prep["w3"], prep["b3"]),
                     (prep["w4"], prep["b4"])):
            h = h.astype(bf16).astype(f32) @ w.astype(f32) + b
            h = jnp.maximum(h, 0.2 * h)
        y = jnp.sum(h * prep["w5"], axis=-1, keepdims=True) + prep["b5"][0]
        return jax.nn.sigmoid(y)

    ref1 = ref_bf16(inputs, labels)
    assert jnp.allclose(out, ref1, atol=2e-3, rtol=2e-3), (out, ref1)

    # Reference 2: plain f32 module semantics (looser: bf16 + approx recip).
    def ref_f32(x, lbl):
        h = jnp.concatenate([x.reshape(x.shape[0], -1), embedding[lbl]], axis=-1)
        for i, (w, b) in enumerate(params):
            h = h @ w + b
            if i < 4:
                h = jnp.where(h > 0, h, 0.2 * h)
        return jax.nn.sigmoid(h)

    ref2 = ref_f32(inputs, labels)
    assert jnp.allclose(out, ref2, atol=2e-2, rtol=2e-2), (out, ref2)

    print("KERNEL_OK")
</pallas_src>

<mosaic_0001>
module attributes {stable_mosaic.version = 11 : i64} {
  func.func @_disc_kernel(%arg0: i32, %arg1: memref<8x200xbf16, #tpu.memory_space<vmem>>, %arg2: memref<8x1xi32, #tpu.memory_space<vmem>>, %arg3: memref<16x256xbf16, #tpu.memory_space<vmem>>, %arg4: memref<200x256xbf16, #tpu.memory_space<vmem>>, %arg5: memref<1x256xf32, #tpu.memory_space<vmem>>, %arg6: memref<256x256xbf16, #tpu.memory_space<vmem>>, %arg7: memref<1x256xf32, #tpu.memory_space<vmem>>, %arg8: memref<256x128xbf16, #tpu.memory_space<vmem>>, %arg9: memref<1x128xf32, #tpu.memory_space<vmem>>, %arg10: memref<128x64xbf16, #tpu.memory_space<vmem>>, %arg11: memref<1x64xf32, #tpu.memory_space<vmem>>, %arg12: memref<1x64xf32, #tpu.memory_space<vmem>>, %arg13: memref<1xf32, #tpu.memory_space<smem>>, %arg14: memref<8x1xf32, #tpu.memory_space<vmem>>) attributes {dimension_semantics = [#tpu.dimension_semantics<parallel>], iteration_bounds = array<i64: 1>, scalar_prefetch = 0 : i64, scratch_operands = 0 : i64, tpu.core_type = #tpu.core_type<tc>, window_params = [{transform_indices = @transform_0, window_bounds = array<i64: 8, 200>}, {transform_indices = @transform_1, window_bounds = array<i64: 8, 1>}, {pipeline_mode = #tpu.pipeline_mode<synchronous>, transform_indices = @transform_2, window_bounds = array<i64: 16, 256>}, {pipeline_mode = #tpu.pipeline_mode<synchronous>, transform_indices = @transform_3, window_bounds = array<i64: 200, 256>}, {pipeline_mode = #tpu.pipeline_mode<synchronous>, transform_indices = @transform_4, window_bounds = array<i64: 1, 256>}, {pipeline_mode = #tpu.pipeline_mode<synchronous>, transform_indices = @transform_5, window_bounds = array<i64: 256, 256>}, {pipeline_mode = #tpu.pipeline_mode<synchronous>, transform_indices = @transform_6, window_bounds = array<i64: 1, 256>}, {pipeline_mode = #tpu.pipeline_mode<synchronous>, transform_indices = @transform_7, window_bounds = array<i64: 256, 128>}, {pipeline_mode = #tpu.pipeline_mode<synchronous>, transform_indices = @transform_8, window_bounds = array<i64: 1, 128>}, {pipeline_mode = #tpu.pipeline_mode<synchronous>, transform_indices = @transform_9, window_bounds = array<i64: 128, 64>}, {pipeline_mode = #tpu.pipeline_mode<synchronous>, transform_indices = @transform_10, window_bounds = array<i64: 1, 64>}, {pipeline_mode = #tpu.pipeline_mode<synchronous>, transform_indices = @transform_11, window_bounds = array<i64: 1, 64>}, {transform_indices = @transform_12, window_bounds = array<i64: 1>}, {transform_indices = @transform_13, window_bounds = array<i64: 8, 1>}]} {
    %c0 = arith.constant 0 : index
    %c0_0 = arith.constant 0 : index
    %0 = vector.load %arg1[%c0, %c0_0] : memref<8x200xbf16, #tpu.memory_space<vmem>>, vector<8x200xbf16>
    %1 = tpu.iota {dimensions = array<i32: 1>} : vector<8x16xi32>
    %c0_1 = arith.constant 0 : index
    %c0_2 = arith.constant 0 : index
    %2 = vector.load %arg2[%c0_1, %c0_2] : memref<8x1xi32, #tpu.memory_space<vmem>>, vector<8x1xi32>
    %3 = vector.broadcast %2 : vector<8x1xi32> to vector<8x16xi32>
    %4 = arith.cmpi eq, %3, %1 : vector<8x16xi32>
    %5 = arith.extui %4 : vector<8x16xi1> to vector<8x16xi32>
    %6 = arith.sitofp %5 : vector<8x16xi32> to vector<8x16xf32>
    %7 = arith.truncf %6 : vector<8x16xf32> to vector<8x16xbf16>
    %c0_3 = arith.constant 0 : index
    %c0_4 = arith.constant 0 : index
    %8 = vector.load %arg4[%c0_3, %c0_4] : memref<200x256xbf16, #tpu.memory_space<vmem>>, vector<200x256xbf16>
    %cst = arith.constant dense<0.000000e+00> : vector<8x256xf32>
    %9 = tpu.matmul %0, %8, %cst {dimension_numbers = #tpu.dot_dimension_numbers<[1], [0], [0], [1], [0, 0, 1, 1], [], []>} : vector<8x200xbf16>, vector<200x256xbf16>, vector<8x256xf32> -> vector<8x256xf32>
    %c0_5 = arith.constant 0 : index
    %c0_6 = arith.constant 0 : index
    %10 = vector.load %arg3[%c0_5, %c0_6] : memref<16x256xbf16, #tpu.memory_space<vmem>>, vector<16x256xbf16>
    %cst_7 = arith.constant dense<0.000000e+00> : vector<8x256xf32>
    %11 = tpu.matmul %7, %10, %cst_7 {dimension_numbers = #tpu.dot_dimension_numbers<[1], [0], [0], [1], [0, 0, 1, 1], [], []>} : vector<8x16xbf16>, vector<16x256xbf16>, vector<8x256xf32> -> vector<8x256xf32>
    %12 = arith.addf %9, %11 : vector<8x256xf32>
    %c0_8 = arith.constant 0 : index
    %c0_9 = arith.constant 0 : index
    %13 = vector.load %arg5[%c0_8, %c0_9] : memref<1x256xf32, #tpu.memory_space<vmem>>, vector<1x256xf32>
    %14 = vector.broadcast %13 : vector<1x256xf32> to vector<8x256xf32>
    %15 = arith.addf %12, %14 : vector<8x256xf32>
    %cst_10 = arith.constant 2.000000e-01 : f32
    %16 = vector.broadcast %cst_10 : f32 to vector<8x256xf32>
    %17 = arith.mulf %16, %15 : vector<8x256xf32>
    %18 = arith.maximumf %15, %17 : vector<8x256xf32>
    %19 = arith.truncf %18 : vector<8x256xf32> to vector<8x256xbf16>
    %c0_11 = arith.constant 0 : index
    %c0_12 = arith.constant 0 : index
    %20 = vector.load %arg6[%c0_11, %c0_12] : memref<256x256xbf16, #tpu.memory_space<vmem>>, vector<256x256xbf16>
    %cst_13 = arith.constant dense<0.000000e+00> : vector<8x256xf32>
    %21 = tpu.matmul %19, %20, %cst_13 {dimension_numbers = #tpu.dot_dimension_numbers<[1], [0], [0], [1], [0, 0, 1, 1], [], []>} : vector<8x256xbf16>, vector<256x256xbf16>, vector<8x256xf32> -> vector<8x256xf32>
    %c0_14 = arith.constant 0 : index
    %c0_15 = arith.constant 0 : index
    %22 = vector.load %arg7[%c0_14, %c0_15] : memref<1x256xf32, #tpu.memory_space<vmem>>, vector<1x256xf32>
    %23 = vector.broadcast %22 : vector<1x256xf32> to vector<8x256xf32>
    %24 = arith.addf %21, %23 : vector<8x256xf32>
    %cst_16 = arith.constant 2.000000e-01 : f32
    %25 = vector.broadcast %cst_16 : f32 to vector<8x256xf32>
    %26 = arith.mulf %25, %24 : vector<8x256xf32>
    %27 = arith.maximumf %24, %26 : vector<8x256xf32>
    %28 = arith.truncf %27 : vector<8x256xf32> to vector<8x256xbf16>
    %c0_17 = arith.constant 0 : index
    %c0_18 = arith.constant 0 : index
    %29 = vector.load %arg8[%c0_17, %c0_18] : memref<256x128xbf16, #tpu.memory_space<vmem>>, vector<256x128xbf16>
    %cst_19 = arith.constant dense<0.000000e+00> : vector<8x128xf32>
    %30 = tpu.matmul %28, %29, %cst_19 {dimension_numbers = #tpu.dot_dimension_numbers<[1], [0], [0], [1], [0, 0, 1, 1], [], []>} : vector<8x256xbf16>, vector<256x128xbf16>, vector<8x128xf32> -> vector<8x128xf32>
    %c0_20 = arith.constant 0 : index
    %c0_21 = arith.constant 0 : index
    %31 = vector.load %arg9[%c0_20, %c0_21] : memref<1x128xf32, #tpu.memory_space<vmem>>, vector<1x128xf32>
    %32 = vector.broadcast %31 : vector<1x128xf32> to vector<8x128xf32>
    %33 = arith.addf %30, %32 : vector<8x128xf32>
    %cst_22 = arith.constant 2.000000e-01 : f32
    %34 = vector.broadcast %cst_22 : f32 to vector<8x128xf32>
    %35 = arith.mulf %34, %33 : vector<8x128xf32>
    %36 = arith.maximumf %33, %35 : vector<8x128xf32>
    %37 = arith.truncf %36 : vector<8x128xf32> to vector<8x128xbf16>
    %c0_23 = arith.constant 0 : index
    %c0_24 = arith.constant 0 : index
    %38 = vector.load %arg10[%c0_23, %c0_24] : memref<128x64xbf16, #tpu.memory_space<vmem>>, vector<128x64xbf16>
    %cst_25 = arith.constant dense<0.000000e+00> : vector<8x64xf32>
    %39 = tpu.matmul %37, %38, %cst_25 {dimension_numbers = #tpu.dot_dimension_numbers<[1], [0], [0], [1], [0, 0, 1, 1], [], []>} : vector<8x128xbf16>, vector<128x64xbf16>, vector<8x64xf32> -> vector<8x64xf32>
    %c0_26 = arith.constant 0 : index
    %c0_27 = arith.constant 0 : index
    %40 = vector.load %arg11[%c0_26, %c0_27] : memref<1x64xf32, #tpu.memory_space<vmem>>, vector<1x64xf32>
    %41 = vector.broadcast %40 : vector<1x64xf32> to vector<8x64xf32>
    %42 = arith.addf %39, %41 : vector<8x64xf32>
    %cst_28 = arith.constant 2.000000e-01 : f32
    %43 = vector.broadcast %cst_28 : f32 to vector<8x64xf32>
    %44 = arith.mulf %43, %42 : vector<8x64xf32>
    %45 = arith.maximumf %42, %44 : vector<8x64xf32>
    %c0_29 = arith.constant 0 : index
    %c0_30 = arith.constant 0 : index
    %46 = vector.load %arg12[%c0_29, %c0_30] : memref<1x64xf32, #tpu.memory_space<vmem>>, vector<1x64xf32>
    %47 = vector.broadcast %46 : vector<1x64xf32> to vector<8x64xf32>
    %48 = arith.mulf %45, %47 : vector<8x64xf32>
    %cst_31 = arith.constant dense<0.000000e+00> : vector<8xf32>
    %49 = vector.multi_reduction <add>, %48, %cst_31 [1] : vector<8x64xf32> to vector<8xf32>
    %50 = vector.shape_cast %49 : vector<8xf32> to vector<8x1xf32>
    %c0_32 = arith.constant 0 : index
    %51 = memref.load %arg13[%c0_32] : memref<1xf32, #tpu.memory_space<smem>>
    %52 = vector.broadcast %51 : f32 to vector<8x1xf32>
    %53 = arith.addf %50, %52 : vector<8x1xf32>
    %cst_33 = arith.constant 0.000000e+00 : f32
    %54 = vector.broadcast %cst_33 : f32 to vector<8x1xf32>
    %55 = arith.subf %54, %53 : vector<8x1xf32>
    %56 = math.exp %55 : vector<8x1xf32>
    %cst_34 = arith.constant 1.000000e+00 : f32
    %57 = vector.broadcast %cst_34 : f32 to vector<8x1xf32>
    %58 = arith.addf %57, %56 : vector<8x1xf32>
    %59 = tpu.reciprocal %58 {approx = true} : vector<8x1xf32> -> vector<8x1xf32>
    %c0_35 = arith.constant 0 : index
    %c0_36 = arith.constant 0 : index
    %60 = vector.load %arg14[%c0_35, %c0_36] : memref<8x1xf32, #tpu.memory_space<vmem>>, vector<8x1xf32>
    tpu.vector_store %arg14[%c0_35, %c0_36], %59 {strides = array<i32>} : memref<8x1xf32, #tpu.memory_space<vmem>>, vector<8x1xf32>,
    return
  }
  func.func @transform_0(%arg0: i32) -> (i32, i32) {
    %c0_i32 = arith.constant 0 : i32
    %c0_i32_0 = arith.constant 0 : i32
    return %arg0, %c0_i32 : i32, i32
  }
  func.func @transform_1(%arg0: i32) -> (i32, i32) {
    %c0_i32 = arith.constant 0 : i32
    %c0_i32_0 = arith.constant 0 : i32
    return %arg0, %c0_i32 : i32, i32
  }
  func.func @transform_2(%arg0: i32) -> (i32, i32) {
    %c0_i32 = arith.constant 0 : i32
    %c0_i32_0 = arith.constant 0 : i32
    %c0_i32_1 = arith.constant 0 : i32
    return %c0_i32, %c0_i32_0 : i32, i32
  }
  func.func @transform_3(%arg0: i32) -> (i32, i32) {
    %c0_i32 = arith.constant 0 : i32
    %c0_i32_0 = arith.constant 0 : i32
    %c0_i32_1 = arith.constant 0 : i32
    return %c0_i32, %c0_i32_0 : i32, i32
  }
  func.func @transform_4(%arg0: i32) -> (i32, i32) {
    %c0_i32 = arith.constant 0 : i32
    %c0_i32_0 = arith.constant 0 : i32
    %c0_i32_1 = arith.constant 0 : i32
    return %c0_i32, %c0_i32_0 : i32, i32
  }
  func.func @transform_5(%arg0: i32) -> (i32, i32) {
    %c0_i32 = arith.constant 0 : i32
    %c0_i32_0 = arith.constant 0 : i32
    %c0_i32_1 = arith.constant 0 : i32
    return %c0_i32, %c0_i32_0 : i32, i32
  }
  func.func @transform_6(%arg0: i32) -> (i32, i32) {
    %c0_i32 = arith.constant 0 : i32
    %c0_i32_0 = arith.constant 0 : i32
    %c0_i32_1 = arith.constant 0 : i32
    return %c0_i32, %c0_i32_0 : i32, i32
  }
  func.func @transform_7(%arg0: i32) -> (i32, i32) {
    %c0_i32 = arith.constant 0 : i32
    %c0_i32_0 = arith.constant 0 : i32
    %c0_i32_1 = arith.constant 0 : i32
    return %c0_i32, %c0_i32_0 : i32, i32
  }
  func.func @transform_8(%arg0: i32) -> (i32, i32) {
    %c0_i32 = arith.constant 0 : i32
    %c0_i32_0 = arith.constant 0 : i32
    %c0_i32_1 = arith.constant 0 : i32
    return %c0_i32, %c0_i32_0 : i32, i32
  }
  func.func @transform_9(%arg0: i32) -> (i32, i32) {
    %c0_i32 = arith.constant 0 : i32
    %c0_i32_0 = arith.constant 0 : i32
    %c0_i32_1 = arith.constant 0 : i32
    return %c0_i32, %c0_i32_0 : i32, i32
  }
  func.func @transform_10(%arg0: i32) -> (i32, i32) {
    %c0_i32 = arith.constant 0 : i32
    %c0_i32_0 = arith.constant 0 : i32
    %c0_i32_1 = arith.constant 0 : i32
    return %c0_i32, %c0_i32_0 : i32, i32
  }
  func.func @transform_11(%arg0: i32) -> (i32, i32) {
    %c0_i32 = arith.constant 0 : i32
    %c0_i32_0 = arith.constant 0 : i32
    %c0_i32_1 = arith.constant 0 : i32
    return %c0_i32, %c0_i32_0 : i32, i32
  }
  func.func @transform_12(%arg0: i32) -> i32 {
    %c0_i32 = arith.constant 0 : i32
    %c0_i32_0 = arith.constant 0 : i32
    return %c0_i32 : i32
  }
  func.func @transform_13(%arg0: i32) -> (i32, i32) {
    %c0_i32 = arith.constant 0 : i32
    %c0_i32_0 = arith.constant 0 : i32
    return %arg0, %c0_i32 : i32, i32
  }
}

</mosaic_0001>

<llo_original>
// kernel: tpu_custom_call.1
$region0: #{tpu_custom_call.1}
  #allocation0 [shape = 'u32[]', space=smem, size = 0x4, offset = 0x4, fixed_abs, tag = 'smem constant byte address 0x4 - core index']
  #allocation1 [shape = 'u32[144,128]{1,0:T(1,128)}', space=vmem, size = 0x12000, scoped, tag = 'internal scratch']
  #allocation2 [shape = 'f32[1]{0:T(128)S(6)}', space=smem, size = 0x200, scoped, tag = 'scoped memory for tpu_custom_call.1']
  %s0 = inlined_call_operand.hbm [shape: bf16[8,200], index: 0, kind: input, shape index: {}]
  %s1 = inlined_call_operand.vmem [shape: s32[8,1], index: 1, kind: input, shape index: {}]
  %s2 = inlined_call_operand.hbm [shape: bf16[16,256], index: 2, kind: input, shape index: {}]
  %s3 = inlined_call_operand.hbm [shape: bf16[200,256], index: 3, kind: input, shape index: {}]
  %s4 = inlined_call_operand.vmem [shape: f32[1,256], index: 4, kind: input, shape index: {}]
  %s5 = inlined_call_operand.hbm [shape: bf16[256,256], index: 5, kind: input, shape index: {}]
  %s6 = inlined_call_operand.vmem [shape: f32[1,256], index: 6, kind: input, shape index: {}]
  %s7 = inlined_call_operand.vmem [shape: bf16[256,128], index: 7, kind: input, shape index: {}]
  %s8 = inlined_call_operand.vmem [shape: f32[1,128], index: 8, kind: input, shape index: {}]
  %s9 = inlined_call_operand.vmem [shape: bf16[128,64], index: 9, kind: input, shape index: {}]
  %s10 = inlined_call_operand.vmem [shape: f32[1,64], index: 10, kind: input, shape index: {}]
  %s11 = inlined_call_operand.vmem [shape: f32[1,64], index: 11, kind: input, shape index: {}]
  %s12 = inlined_call_operand.<no memory space> [shape: f32[1], index: 12, kind: input, shape index: {}]
  %s13 = inlined_call_operand.vmem [shape: f32[8,1], index: 13, kind: output, shape index: {}]
  %s14 = sld [smem:[#allocation0]]
  $region78: #{tpu_custom_call.1} parent=0
    _
  %s16 = ssub.s32 1, %s14
  %s17 = scalar_select 0, %s16, %s14
  %18 = sst [smem:[#allocation2]] %s12
  $region1: #{tpu_custom_call.1} parent=0
    #allocation3 [shape = 'u8[4096]{0}', space=vmem, size = 0x1000, scoped, tag = 'input window, operand 0, single buffered']
    #allocation4 [shape = 's32[1]{0}', space=sflag, size = 0x4, scoped, tag = 'scoped memory for tpu_custom_call.1']
    #allocation5 [shape = 'u8[8192]{0}', space=vmem, size = 0x2000, scoped, tag = 'input window, operand 2, single buffered']
    #allocation6 [shape = 's32[1]{0}', space=sflag, size = 0x4, scoped, tag = 'scoped memory for tpu_custom_call.1']
    #allocation7 [shape = 'u8[102400]{0}', space=vmem, size = 0x19000, scoped, tag = 'input window, operand 3, single buffered']
    #allocation8 [shape = 'u8[131072]{0}', space=vmem, size = 0x20000, scoped, tag = 'input window, operand 5, single buffered']
    #allocation9 [shape = 's32[1]{0}', space=sflag, size = 0x4, scoped, tag = 'scoped memory for tpu_custom_call.1']
    %19 = vsyncpa [#allocation4], 0
    %20 = vsyncpa [#allocation6], 0
    %21 = vsyncpa [#allocation9], 0
    // Predicated region
    $region2: #{tpu_custom_call.1} parent=1 // pred_check
      _
    $region3: #{tpu_custom_call.1} parent=1 // pred_check_branch
      %23 = sbr.rel (0) target = $region5
    $region4: #{tpu_custom_call.1} parent=1 // pred_region
      %s25 = ssub.s32 128, 128
      %26 = vsyncadd [#allocation4], %s25
      %s28 = sshll.u32 [#allocation3], 4
      %s29 = int_to_ptr.vmem [resolvable:$true] %s28
      %31 = dma.hbm_to_vmem [thread:$0]  %s0, 128, %s29, [#allocation4]
    $region5: #{tpu_custom_call.1} parent=1 // pred_fallthru
      _
    // Predicated region
    $region6: #{tpu_custom_call.1} parent=1 // pred_check
      _
    $region7: #{tpu_custom_call.1} parent=1 // pred_check_branch
      %33 = sbr.rel (0) target = $region9
    $region8: #{tpu_custom_call.1} parent=1 // pred_region
      _
    $region9: #{tpu_custom_call.1} parent=1 // pred_fallthru
      _
    // Predicated region
    $region10: #{tpu_custom_call.1} parent=1 // pred_check
      _
    $region11: #{tpu_custom_call.1} parent=1 // pred_check_branch
      %35 = sbr.rel (0) target = $region13
    $region12: #{tpu_custom_call.1} parent=1 // pred_region
      %s37 = ssub.s32 256, 256
      %38 = vsyncadd [#allocation6], %s37
      %s39 = sshll.u32 [#allocation5], 4
      %s40 = int_to_ptr.vmem [resolvable:$true] %s39
      %45 = dma.hbm_to_vmem [thread:$0]  %s2, 256, %s40, [#allocation6], 128, 128, 8
    $region13: #{tpu_custom_call.1} parent=1 // pred_fallthru
      _
    // Predicated region
    $region14: #{tpu_custom_call.1} parent=1 // pred_check
      _
    $region15: #{tpu_custom_call.1} parent=1 // pred_check_branch
      %47 = sbr.rel (0) target = $region17
    $region16: #{tpu_custom_call.1} parent=1 // pred_region
      %s49 = ssub.s32 3200, 3200
      %50 = vsyncadd [#allocation6], %s49
      %s51 = sshll.u32 [#allocation7], 4
      %s52 = int_to_ptr.vmem [resolvable:$true] %s51
      %57 = dma.hbm_to_vmem [thread:$0]  %s3, 3200, %s52, [#allocation6], 128, 128, 8
    $region17: #{tpu_custom_call.1} parent=1 // pred_fallthru
      _
    // Predicated region
    $region18: #{tpu_custom_call.1} parent=1 // pred_check
      _
    $region19: #{tpu_custom_call.1} parent=1 // pred_check_branch
      %59 = sbr.rel (0) target = $region21
    $region20: #{tpu_custom_call.1} parent=1 // pred_region
      _
    $region21: #{tpu_custom_call.1} parent=1 // pred_fallthru
      _
    // Predicated region
    $region22: #{tpu_custom_call.1} parent=1 // pred_check
      _
    $region23: #{tpu_custom_call.1} parent=1 // pred_check_branch
      %61 = sbr.rel (0) target = $region25
    $region24: #{tpu_custom_call.1} parent=1 // pred_region
      %s63 = ssub.s32 4096, 4096
      %64 = vsyncadd [#allocation9], %s63
      %s65 = sshll.u32 [#allocation8], 4
      %s66 = int_to_ptr.vmem [resolvable:$true] %s65
      %71 = dma.hbm_to_vmem [thread:$0]  %s5, 4096, %s66, [#allocation9], 128, 128, 8
    $region25: #{tpu_custom_call.1} parent=1 // pred_fallthru
      _
    // Predicated region
    $region26: #{tpu_custom_call.1} parent=1 // pred_check
      _
    $region27: #{tpu_custom_call.1} parent=1 // pred_check_branch
      %73 = sbr.rel (0) target = $region29
    $region28: #{tpu_custom_call.1} parent=1 // pred_region
      _
    $region29: #{tpu_custom_call.1} parent=1 // pred_fallthru
      _
    // Predicated region
    $region30: #{tpu_custom_call.1} parent=1 // pred_check
      _
    $region31: #{tpu_custom_call.1} parent=1 // pred_check_branch
      %75 = sbr.rel (0) target = $region33
    $region32: #{tpu_custom_call.1} parent=1 // pred_region
      _
    $region33: #{tpu_custom_call.1} parent=1 // pred_fallthru
      _
    // Predicated region
    $region34: #{tpu_custom_call.1} parent=1 // pred_check
      _
    $region35: #{tpu_custom_call.1} parent=1 // pred_check_branch
      %77 = sbr.rel (0) target = $region37
    $region36: #{tpu_custom_call.1} parent=1 // pred_region
      _
    $region37: #{tpu_custom_call.1} parent=1 // pred_fallthru
      _
    // Predicated region
    $region38: #{tpu_custom_call.1} parent=1 // pred_check
      _
    $region39: #{tpu_custom_call.1} parent=1 // pred_check_branch
      %79 = sbr.rel (0) target = $region41
    $region40: #{tpu_custom_call.1} parent=1 // pred_region
      _
    $region41: #{tpu_custom_call.1} parent=1 // pred_fallthru
      _
    // Predicated region
    $region42: #{tpu_custom_call.1} parent=1 // pred_check
      _
    $region43: #{tpu_custom_call.1} parent=1 // pred_check_branch
      %81 = sbr.rel (0) target = $region45
    $region44: #{tpu_custom_call.1} parent=1 // pred_region
      _
    $region45: #{tpu_custom_call.1} parent=1 // pred_fallthru
      _
    // Predicated region
    $region46: #{tpu_custom_call.1} parent=1 // pred_check
      _
    $region47: #{tpu_custom_call.1} parent=1 // pred_check_branch
      %83 = sbr.rel (0) target = $region49
    $region48: #{tpu_custom_call.1} parent=1 // pred_region
      _
    $region49: #{tpu_custom_call.1} parent=1 // pred_fallthru
      _
    // Predicated region
    $region50: #{tpu_custom_call.1} parent=1 // pred_check
      _
    $region51: #{tpu_custom_call.1} parent=1 // pred_check_branch
      %85 = sbr.rel (0) target = $region53
    $region52: #{tpu_custom_call.1} parent=1 // pred_region
      _
    $region53: #{tpu_custom_call.1} parent=1 // pred_fallthru
      _
    // Predicated region
    $region54: #{tpu_custom_call.1} parent=1 // pred_check
      _
    $region55: #{tpu_custom_call.1} parent=1 // pred_check_branch
      %87 = sbr.rel (0) target = $region57
    $region56: #{tpu_custom_call.1} parent=1 // pred_region
      %88 = dma.done [#allocation4], 128
    $region57: #{tpu_custom_call.1} parent=1 // pred_fallthru
      _
    // Predicated region
    $region58: #{tpu_custom_call.1} parent=1 // pred_check
      _
    $region59: #{tpu_custom_call.1} parent=1 // pred_check_branch
      %90 = sbr.rel (0) target = $region61
    $region60: #{tpu_custom_call.1} parent=1 // pred_region
      %91 = dma.done [#allocation6], 256
    $region61: #{tpu_custom_call.1} parent=1 // pred_fallthru
      _
    // Predicated region
    $region62: #{tpu_custom_call.1} parent=1 // pred_check
      _
    $region63: #{tpu_custom_call.1} parent=1 // pred_check_branch
      %93 = sbr.rel (0) target = $region65
    $region64: #{tpu_custom_call.1} parent=1 // pred_region
      %94 = dma.done [#allocation6], 3200
    $region65: #{tpu_custom_call.1} parent=1 // pred_fallthru
      _
    // Predicated region
    $region66: #{tpu_custom_call.1} parent=1 // pred_check
      _
    $region67: #{tpu_custom_call.1} parent=1 // pred_check_branch
      %96 = sbr.rel (0) target = $region69
    $region68: #{tpu_custom_call.1} parent=1 // pred_region
      %97 = dma.done [#allocation9], 4096
    $region69: #{tpu_custom_call.1} parent=1 // pred_fallthru
      _
    %v99 = vld [vmem:[#allocation3] sm:$0xff]
    %v100 = vlaneseq
    %v101 = vand.u32 %v100, 127
    %v102 = vld [vmem:[%s1] sm:$0xff]
    %103 = vset.pattern.permute.xlu0 0
    %104 = vperm.xlu0 %103, %v102
    %v105 = vpop.permute.xlu0 %104
    %vm106 = vcmp.eq.s32.totalorder %v105, %v101
    %v107 = vsel %vm106, 1, 0
    %v108 = vcvt.s32.f32 %v107
    %v109 = vpack.c.bf16 %v108, %v108
    %v110 = vld [vmem:[#allocation7] sm:$0xff]
    %v111 = vld [vmem:[#allocation7 + $0x8] sm:$0xff]
    %v112 = vld [vmem:[#allocation7 + $0x10] sm:$0xff]
    %v113 = vld [vmem:[#allocation7 + $0x18] sm:$0xff]
    %v114 = vld [vmem:[#allocation7 + $0x20] sm:$0xff]
    %v115 = vld [vmem:[#allocation7 + $0x28] sm:$0xff]
    %v116 = vld [vmem:[#allocation7 + $0x30] sm:$0xff]
    %v117 = vld [vmem:[#allocation7 + $0x38] sm:$0xff]
    %v118 = vld [vmem:[#allocation7 + $0x40] sm:$0xff]
    %v119 = vld [vmem:[#allocation7 + $0x48] sm:$0xff]
    %v120 = vld [vmem:[#allocation7 + $0x50] sm:$0xff]
    %v121 = vld [vmem:[#allocation7 + $0x58] sm:$0xff]
    %v122 = vld [vmem:[#allocation7 + $0x60] sm:$0xff]
    %v123 = vld [vmem:[#allocation7 + $0x68] sm:$0xff]
    %v124 = vld [vmem:[#allocation7 + $0x70] sm:$0xff]
    %v125 = vld [vmem:[#allocation7 + $0x78] sm:$0xff]
    %v126 = vld [vmem:[#allocation7 + $0x80] sm:$0xff]
    %v127 = vld [vmem:[#allocation7 + $0x88] sm:$0xff]
    %v128 = vld [vmem:[#allocation7 + $0x90] sm:$0xff]
    %v129 = vld [vmem:[#allocation7 + $0x98] sm:$0xff]
    %v130 = vld [vmem:[#allocation7 + $0xa0] sm:$0xff]
    %v131 = vld [vmem:[#allocation7 + $0xa8] sm:$0xff]
    %v132 = vld [vmem:[#allocation7 + $0xb0] sm:$0xff]
    %v133 = vld [vmem:[#allocation7 + $0xb8] sm:$0xff]
    %v134 = vld [vmem:[#allocation7 + $0xc0] sm:$0xff]
    %v135 = vld [vmem:[#allocation5] sm:$0xff]
    %v136 = vld [vmem:[#allocation5 + $0x8] sm:$0xff]
    %v139 = vunpack.c.l.b16 %v135
    %v140 = vunpack.c.h.b16 %v135
    %v141 = vunpack.c.l.b16 %v136
    %v142 = vunpack.c.h.b16 %v136
    %v143 = vpack.c.b16 %v141, %v139
    %v144 = vpack.c.b16 %v142, %v140
    %vm147 = vcmask 130048
    %v149 = vsel %vm147, %v109, 0
    %151 = vmatprep.subr.bf16.mxu0 %v144
    %152 = vmatpush1.bf16.msra.mxu0 %v143
    %153 = vmatprep.subr.bf16.mxu0 0
    %154 = vmatpush1.bf16.msra.mxu0 0
    %155 = vmatprep.subr.bf16.mxu0 0
    %156 = vmatpush1.bf16.msra.mxu0 0
    %157 = vmatprep.subr.bf16.mxu0 0
    %158 = vmatpush1.bf16.msra.mxu0 0
    %159 = vmatprep.subr.bf16.mxu0 0
    %160 = vmatpush1.bf16.msra.mxu0 0
    %161 = vmatprep.subr.bf16.mxu0 0
    %162 = vmatpush1.bf16.msra.mxu0 0
    %163 = vmatprep.subr.bf16.mxu0 0
    %164 = vmatpush1.bf16.msra.mxu0 0
    %165 = vmatprep.subr.bf16.mxu0 0
    %166 = vmatpush1.bf16.msra.mxu0 0
    %167 = vmatprep.subr.bf16.mxu0 0
    %168 = vmatpush1.bf16.msra.mxu0 0
    %169 = vmatprep.subr.bf16.mxu0 0
    %170 = vmatpush1.bf16.msra.mxu0 0
    %171 = vmatprep.subr.bf16.mxu0 0
    %172 = vmatpush1.bf16.msra.mxu0 0
    %173 = vmatprep.subr.bf16.mxu0 0
    %174 = vmatpush1.bf16.msra.mxu0 0
    %175 = vmatprep.subr.bf16.mxu0 0
    %176 = vmatpush1.bf16.msra.mxu0 0
    %177 = vmatprep.subr.bf16.mxu0 0
    %178 = vmatpush1.bf16.msra.mxu0 0
    %179 = vmatprep.subr.bf16.mxu0 0
    %180 = vmatpush1.bf16.msra.mxu0 0
    %181 = vmatprep.subr.bf16.mxu0 0
    %182 = vmatpush1.bf16.msra.mxu0 0
    %183 = vmatprep.mubr.bf16.mxu0 0
    %184 = vmatmul.mubr.bf16.gmra.mrb[0].mxu0 %v149
    %v185 = vpop.f32.mrb[0].mxu0
    %v186 = vadd.f32 0.0, %v185
    %v187 = vpop.f32.mrb[0].mxu0
    %v188 = vadd.f32 0.0, %v187
    %v189 = vpop.f32.mrb[0].mxu0
    %v190 = vpop.f32.mrb[0].mxu0
    %191 = vdwg.mxu0
    %v193 = vunpack.c.l.b16 %v99
    %v194 = vunpack.c.h.b16 %v99
    %v195 = vpack.c.b16 %v193, %v193
    %v196 = vpack.c.b16 %v194, %v194
    %v223 = vunpack.c.l.b16 %v110
    %v224 = vunpack.c.h.b16 %v110
    %v225 = vunpack.c.l.b16 %v111
    %v226 = vunpack.c.h.b16 %v111
    %v227 = vunpack.c.l.b16 %v112
    %v228 = vunpack.c.h.b16 %v112
    %v229 = vunpack.c.l.b16 %v113
    %v230 = vunpack.c.h.b16 %v113
    %v231 = vunpack.c.l.b16 %v114
    %v232 = vunpack.c.h.b16 %v114
    %v233 = vunpack.c.l.b16 %v115
    %v234 = vunpack.c.h.b16 %v115
    %v235 = vunpack.c.l.b16 %v116
    %v236 = vunpack.c.h.b16 %v116
    %v237 = vunpack.c.l.b16 %v117
    %v238 = vunpack.c.h.b16 %v117
    %v239 = vunpack.c.l.b16 %v118
    %v240 = vunpack.c.h.b16 %v118
    %v241 = vunpack.c.l.b16 %v119
    %v242 = vunpack.c.h.b16 %v119
    %v243 = vunpack.c.l.b16 %v120
    %v244 = vunpack.c.h.b16 %v120
    %v245 = vunpack.c.l.b16 %v121
    %v246 = vunpack.c.h.b16 %v121
    %v247 = vunpack.c.l.b16 %v122
    %v248 = vunpack.c.h.b16 %v122
    %v249 = vunpack.c.l.b16 %v123
    %v250 = vunpack.c.h.b16 %v123
    %v251 = vunpack.c.l.b16 %v124
    %v252 = vunpack.c.h.b16 %v124
    %v253 = vunpack.c.l.b16 %v125
    %v254 = vunpack.c.h.b16 %v125
    %v255 = vunpack.c.l.b16 %v126
    %v256 = vunpack.c.h.b16 %v126
    %v257 = vunpack.c.l.b16 %v127
    %v258 = vunpack.c.h.b16 %v127
    %v259 = vunpack.c.l.b16 %v128
    %v260 = vunpack.c.h.b16 %v128
    %v261 = vunpack.c.l.b16 %v129
    %v262 = vunpack.c.h.b16 %v129
    %v263 = vunpack.c.l.b16 %v130
    %v264 = vunpack.c.h.b16 %v130
    %v265 = vunpack.c.l.b16 %v131
    %v266 = vunpack.c.h.b16 %v131
    %v267 = vunpack.c.l.b16 %v132
    %v268 = vunpack.c.h.b16 %v132
    %v269 = vunpack.c.l.b16 %v133
    %v270 = vunpack.c.h.b16 %v133
    %v271 = vunpack.c.l.b16 %v134
    %v272 = vunpack.c.h.b16 %v134
    %v273 = vpack.c.b16 %v225, %v223
    %v274 = vpack.c.b16 %v226, %v224
    %v275 = vpack.c.b16 %v229, %v227
    %v276 = vpack.c.b16 %v230, %v228
    %v277 = vpack.c.b16 %v233, %v231
    %v278 = vpack.c.b16 %v234, %v232
    %v279 = vpack.c.b16 %v237, %v235
    %v280 = vpack.c.b16 %v238, %v236
    %v281 = vpack.c.b16 %v241, %v239
    %v282 = vpack.c.b16 %v242, %v240
    %v283 = vpack.c.b16 %v245, %v243
    %v284 = vpack.c.b16 %v246, %v244
    %v285 = vpack.c.b16 %v249, %v247
    %v286 = vpack.c.b16 %v250, %v248
    %v287 = vpack.c.b16 %v253, %v251
    %v288 = vpack.c.b16 %v254, %v252
    %v289 = vpack.c.b16 %v257, %v255
    %v290 = vpack.c.b16 %v258, %v256
    %v291 = vpack.c.b16 %v261, %v259
    %v292 = vpack.c.b16 %v262, %v260
    %v293 = vpack.c.b16 %v265, %v263
    %v294 = vpack.c.b16 %v266, %v264
    %v295 = vpack.c.b16 %v269, %v267
    %v296 = vpack.c.b16 %v270, %v268
    %v297 = vpack.c.b16 %v271, %v271
    %v298 = vpack.c.b16 %v272, %v272
    %vm323 = vcmask 588800
    %v325 = vsel %vm323, %v196, 0
    %vm327 = vcmask 1043456
    %v329 = vsel %vm327, %v297, 0
    %v332 = vsel %vm327, %v298, 0
    %334 = vmatprep.subr.bf16.mxu0 %v274
    %335 = vmatpush1.bf16.msra.mxu0 %v273
    %336 = vmatprep.subr.bf16.mxu0 %v276
    %337 = vmatpush1.bf16.msra.mxu0 %v275
    %338 = vmatprep.subr.bf16.mxu0 %v278
    %339 = vmatpush1.bf16.msra.mxu0 %v277
    %340 = vmatprep.subr.bf16.mxu0 %v280
    %341 = vmatpush1.bf16.msra.mxu0 %v279
    %342 = vmatprep.subr.bf16.mxu0 %v282
    %343 = vmatpush1.bf16.msra.mxu0 %v281
    %344 = vmatprep.subr.bf16.mxu0 %v284
    %345 = vmatpush1.bf16.msra.mxu0 %v283
    %346 = vmatprep.subr.bf16.mxu0 %v286
    %347 = vmatpush1.bf16.msra.mxu0 %v285
    %348 = vmatprep.subr.bf16.mxu0 %v288
    %349 = vmatpush1.bf16.msra.mxu0 %v287
    %350 = vmatprep.subr.bf16.mxu0 %v290
    %351 = vmatpush1.bf16.msra.mxu0 %v289
    %352 = vmatprep.subr.bf16.mxu0 %v292
    %353 = vmatpush1.bf16.msra.mxu0 %v291
    %354 = vmatprep.subr.bf16.mxu0 %v294
    %355 = vmatpush1.bf16.msra.mxu0 %v293
    %356 = vmatprep.subr.bf16.mxu0 %v296
    %357 = vmatpush1.bf16.msra.mxu0 %v295
    %358 = vmatprep.subr.bf16.mxu0 %v332
    %359 = vmatpush1.bf16.msra.mxu0 %v329
    %360 = vmatprep.subr.bf16.mxu0 0
    %361 = vmatpush1.bf16.msra.mxu0 0
    %362 = vmatprep.subr.bf16.mxu0 0
    %363 = vmatpush1.bf16.msra.mxu0 0
    %364 = vmatprep.subr.bf16.mxu0 0
    %365 = vmatpush1.bf16.msra.mxu0 0
    %366 = vmatprep.mubr.bf16.mxu0 %v325
    %367 = vmatmul.mubr.bf16.gmra.mrb[0].mxu0 %v195
    %v368 = vpop.f32.mrb[0].mxu0
    %v369 = vadd.f32 %v186, %v368
    %v370 = vpop.f32.mrb[0].mxu0
    %v371 = vadd.f32 %v188, %v370
    %v372 = vpop.f32.mrb[0].mxu0
    %v373 = vpop.f32.mrb[0].mxu0
    %374 = vdwg.mxu0
    %v375 = vld [vmem:[%s4] sm:$0x3]
    %v377 = vlaneseq
    %v378 = vshrl.u32 %v377, 7
    %v379 = vsub.s32 0, %v378
    %v380 = vrot.slane %v375, %v379
    %v381 = vlaneseq
    %v382 = vshrl.u32 %v381, 7
    %v383 = vsub.s32 1, %v382
    %v384 = vrot.slane %v375, %v383
    %v387 = vadd.f32 %v369, %v380
    %v388 = vadd.f32 %v371, %v384
    %v389 = vmul.f32 %v387, 0.2
    %v390 = vmul.f32 %v388, 0.2
    %v391 = vmax.f32 %v387, %v389
    %v392 = vmax.f32 %v388, %v390
    %v393 = vpack.c.bf16 %v391, %v391
    %v394 = vpack.c.bf16 %v392, %v392
    %v395 = vld [vmem:[#allocation8] sm:$0xff]
    %v396 = vld [vmem:[#allocation8 + $0x8] sm:$0xff]
    %v397 = vld [vmem:[#allocation8 + $0x10] sm:$0xff]
    %v398 = vld [vmem:[#allocation8 + $0x18] sm:$0xff]
    %v399 = vld [vmem:[#allocation8 + $0x20] sm:$0xff]
    %v400 = vld [vmem:[#allocation8 + $0x28] sm:$0xff]
    %v401 = vld [vmem:[#allocation8 + $0x30] sm:$0xff]
    %v402 = vld [vmem:[#allocation8 + $0x38] sm:$0xff]
    %v403 = vld [vmem:[#allocation8 + $0x40] sm:$0xff]
    %v404 = vld [vmem:[#allocation8 + $0x48] sm:$0xff]
    %v405 = vld [vmem:[#allocation8 + $0x50] sm:$0xff]
    %v406 = vld [vmem:[#allocation8 + $0x58] sm:$0xff]
    %v407 = vld [vmem:[#allocation8 + $0x60] sm:$0xff]
    %v408 = vld [vmem:[#allocation8 + $0x68] sm:$0xff]
    %v409 = vld [vmem:[#allocation8 + $0x70] sm:$0xff]
    %v410 = vld [vmem:[#allocation8 + $0x78] sm:$0xff]
    %v411 = vld [vmem:[#allocation8 + $0x80] sm:$0xff]
    %v412 = vld [vmem:[#allocation8 + $0x88] sm:$0xff]
    %v413 = vld [vmem:[#allocation8 + $0x90] sm:$0xff]
    %v414 = vld [vmem:[#allocation8 + $0x98] sm:$0xff]
    %v415 = vld [vmem:[#allocation8 + $0xa0] sm:$0xff]
    %v416 = vld [vmem:[#allocation8 + $0xa8] sm:$0xff]
    %v417 = vld [vmem:[#allocation8 + $0xb0] sm:$0xff]
    %v418 = vld [vmem:[#allocation8 + $0xb8] sm:$0xff]
    %v419 = vld [vmem:[#allocation8 + $0xc0] sm:$0xff]
    %v420 = vld [vmem:[#allocation8 + $0xc8] sm:$0xff]
    %v421 = vld [vmem:[#allocation8 + $0xd0] sm:$0xff]
    %v422 = vld [vmem:[#allocation8 + $0xd8] sm:$0xff]
    %v423 = vld [vmem:[#allocation8 + $0xe0] sm:$0xff]
    %v424 = vld [vmem:[#allocation8 + $0xe8] sm:$0xff]
    %v425 = vld [vmem:[#allocation8 + $0xf0] sm:$0xff]
    %v426 = vld [vmem:[#allocation8 + $0xf8] sm:$0xff]
    %v427 = vld [vmem:[%s6] sm:$0x3]
    %v429 = vlaneseq
    %v430 = vshrl.u32 %v429, 7
    %v431 = vsub.s32 0, %v430
    %v432 = vrot.slane %v427, %v431
    %v433 = vlaneseq
    %v434 = vshrl.u32 %v433, 7
    %v435 = vsub.s32 1, %v434
    %v436 = vrot.slane %v427, %v435
    %v471 = vunpack.c.l.b16 %v395
    %v472 = vunpack.c.h.b16 %v395
    %v473 = vunpack.c.l.b16 %v396
    %v474 = vunpack.c.h.b16 %v396
    %v475 = vunpack.c.l.b16 %v397
    %v476 = vunpack.c.h.b16 %v397
    %v477 = vunpack.c.l.b16 %v398
    %v478 = vunpack.c.h.b16 %v398
    %v479 = vunpack.c.l.b16 %v399
    %v480 = vunpack.c.h.b16 %v399
    %v481 = vunpack.c.l.b16 %v400
    %v482 = vunpack.c.h.b16 %v400
    %v483 = vunpack.c.l.b16 %v401
    %v484 = vunpack.c.h.b16 %v401
    %v485 = vunpack.c.l.b16 %v402
    %v486 = vunpack.c.h.b16 %v402
    %v487 = vunpack.c.l.b16 %v403
    %v488 = vunpack.c.h.b16 %v403
    %v489 = vunpack.c.l.b16 %v404
    %v490 = vunpack.c.h.b16 %v404
    %v491 = vunpack.c.l.b16 %v405
    %v492 = vunpack.c.h.b16 %v405
    %v493 = vunpack.c.l.b16 %v406
    %v494 = vunpack.c.h.b16 %v406
    %v495 = vunpack.c.l.b16 %v407
    %v496 = vunpack.c.h.b16 %v407
    %v497 = vunpack.c.l.b16 %v408
    %v498 = vunpack.c.h.b16 %v408
    %v499 = vunpack.c.l.b16 %v409
    %v500 = vunpack.c.h.b16 %v409
    %v501 = vunpack.c.l.b16 %v410
    %v502 = vunpack.c.h.b16 %v410
    %v503 = vunpack.c.l.b16 %v411
    %v504 = vunpack.c.h.b16 %v411
    %v505 = vunpack.c.l.b16 %v412
    %v506 = vunpack.c.h.b16 %v412
    %v507 = vunpack.c.l.b16 %v413
    %v508 = vunpack.c.h.b16 %v413
    %v509 = vunpack.c.l.b16 %v414
    %v510 = vunpack.c.h.b16 %v414
    %v511 = vunpack.c.l.b16 %v415
    %v512 = vunpack.c.h.b16 %v415
    %v513 = vunpack.c.l.b16 %v416
    %v514 = vunpack.c.h.b16 %v416
    %v515 = vunpack.c.l.b16 %v417
    %v516 = vunpack.c.h.b16 %v417
    %v517 = vunpack.c.l.b16 %v418
    %v518 = vunpack.c.h.b16 %v418
    %v519 = vunpack.c.l.b16 %v419
    %v520 = vunpack.c.h.b16 %v419
    %v521 = vunpack.c.l.b16 %v420
    %v522 = vunpack.c.h.b16 %v420
    %v523 = vunpack.c.l.b16 %v421
    %v524 = vunpack.c.h.b16 %v421
    %v525 = vunpack.c.l.b16 %v422
    %v526 = vunpack.c.h.b16 %v422
    %v527 = vunpack.c.l.b16 %v423
    %v528 = vunpack.c.h.b16 %v423
    %v529 = vunpack.c.l.b16 %v424
    %v530 = vunpack.c.h.b16 %v424
    %v531 = vunpack.c.l.b16 %v425
    %v532 = vunpack.c.h.b16 %v425
    %v533 = vunpack.c.l.b16 %v426
    %v534 = vunpack.c.h.b16 %v426
    %v535 = vpack.c.b16 %v473, %v471
    %v536 = vpack.c.b16 %v474, %v472
    %v537 = vpack.c.b16 %v477, %v475
    %v538 = vpack.c.b16 %v478, %v476
    %v539 = vpack.c.b16 %v481, %v479
    %v540 = vpack.c.b16 %v482, %v480
    %v541 = vpack.c.b16 %v485, %v483
    %v542 = vpack.c.b16 %v486, %v484
    %v543 = vpack.c.b16 %v489, %v487
    %v544 = vpack.c.b16 %v490, %v488
    %v545 = vpack.c.b16 %v493, %v491
    %v546 = vpack.c.b16 %v494, %v492
    %v547 = vpack.c.b16 %v497, %v495
    %v548 = vpack.c.b16 %v498, %v496
    %v549 = vpack.c.b16 %v501, %v499
    %v550 = vpack.c.b16 %v502, %v500
    %v551 = vpack.c.b16 %v505, %v503
    %v552 = vpack.c.b16 %v506, %v504
    %v553 = vpack.c.b16 %v509, %v507
    %v554 = vpack.c.b16 %v510, %v508
    %v555 = vpack.c.b16 %v513, %v511
    %v556 = vpack.c.b16 %v514, %v512
    %v557 = vpack.c.b16 %v517, %v515
    %v558 = vpack.c.b16 %v518, %v516
    %v559 = vpack.c.b16 %v521, %v519
    %v560 = vpack.c.b16 %v522, %v520
    %v561 = vpack.c.b16 %v525, %v523
    %v562 = vpack.c.b16 %v526, %v524
    %v563 = vpack.c.b16 %v529, %v527
    %v564 = vpack.c.b16 %v530, %v528
    %v565 = vpack.c.b16 %v533, %v531
    %v566 = vpack.c.b16 %v534, %v532
    %599 = vmatprep.subr.bf16.mxu0 %v536
    %600 = vmatpush1.bf16.msra.mxu0 %v535
    %601 = vmatprep.subr.bf16.mxu0 %v538
    %602 = vmatpush1.bf16.msra.mxu0 %v537
    %603 = vmatprep.subr.bf16.mxu0 %v540
    %604 = vmatpush1.bf16.msra.mxu0 %v539
    %605 = vmatprep.subr.bf16.mxu0 %v542
    %606 = vmatpush1.bf16.msra.mxu0 %v541
    %607 = vmatprep.subr.bf16.mxu0 %v544
    %608 = vmatpush1.bf16.msra.mxu0 %v543
    %609 = vmatprep.subr.bf16.mxu0 %v546
    %610 = vmatpush1.bf16.msra.mxu0 %v545
    %611 = vmatprep.subr.bf16.mxu0 %v548
    %612 = vmatpush1.bf16.msra.mxu0 %v547
    %613 = vmatprep.subr.bf16.mxu0 %v550
    %614 = vmatpush1.bf16.msra.mxu0 %v549
    %615 = vmatprep.subr.bf16.mxu0 %v552
    %616 = vmatpush1.bf16.msra.mxu0 %v551
    %617 = vmatprep.subr.bf16.mxu0 %v554
    %618 = vmatpush1.bf16.msra.mxu0 %v553
    %619 = vmatprep.subr.bf16.mxu0 %v556
    %620 = vmatpush1.bf16.msra.mxu0 %v555
    %621 = vmatprep.subr.bf16.mxu0 %v558
    %622 = vmatpush1.bf16.msra.mxu0 %v557
    %623 = vmatprep.subr.bf16.mxu0 %v560
    %624 = vmatpush1.bf16.msra.mxu0 %v559
    %625 = vmatprep.subr.bf16.mxu0 %v562
    %626 = vmatpush1.bf16.msra.mxu0 %v561
    %627 = vmatprep.subr.bf16.mxu0 %v564
    %628 = vmatpush1.bf16.msra.mxu0 %v563
    %629 = vmatprep.subr.bf16.mxu0 %v566
    %630 = vmatpush1.bf16.msra.mxu0 %v565
    %631 = vmatprep.mubr.bf16.mxu0 %v394
    %632 = vmatmul.mubr.bf16.gmra.mrb[0].mxu0 %v393
    %v633 = vpop.f32.mrb[0].mxu0
    %v634 = vadd.f32 %v432, %v633
    %v635 = vpop.f32.mrb[0].mxu0
    %v636 = vadd.f32 %v436, %v635
    %v637 = vpop.f32.mrb[0].mxu0
    %v638 = vpop.f32.mrb[0].mxu0
    %639 = vdwg.mxu0
    %v640 = vmul.f32 %v634, 0.2
    %v641 = vmul.f32 %v636, 0.2
    %v642 = vmax.f32 %v634, %v640
    %v643 = vmax.f32 %v636, %v641
    %v644 = vpack.c.bf16 %v642, %v642
    %v645 = vpack.c.bf16 %v643, %v643
    %v646 = vld [vmem:[%s7] sm:$0xf]
    %v647 = vld [vmem:[%s7 + $0x4] sm:$0xf]
    %v648 = vld [vmem:[%s7 + $0x8] sm:$0xf]
    %v649 = vld [vmem:[%s7 + $0xc] sm:$0xf]
    %v650 = vld [vmem:[%s7 + $0x10] sm:$0xf]
    %v651 = vld [vmem:[%s7 + $0x14] sm:$0xf]
    %v652 = vld [vmem:[%s7 + $0x18] sm:$0xf]
    %v653 = vld [vmem:[%s7 + $0x1c] sm:$0xf]
    %v654 = vld [vmem:[%s7 + $0x20] sm:$0xf]
    %v655 = vld [vmem:[%s7 + $0x24] sm:$0xf]
    %v656 = vld [vmem:[%s7 + $0x28] sm:$0xf]
    %v657 = vld [vmem:[%s7 + $0x2c] sm:$0xf]
    %v658 = vld [vmem:[%s7 + $0x30] sm:$0xf]
    %v659 = vld [vmem:[%s7 + $0x34] sm:$0xf]
    %v660 = vld [vmem:[%s7 + $0x38] sm:$0xf]
    %v661 = vld [vmem:[%s7 + $0x3c] sm:$0xf]
    %v662 = vld [vmem:[%s7 + $0x40] sm:$0xf]
    %v663 = vld [vmem:[%s7 + $0x44] sm:$0xf]
    %v664 = vld [vmem:[%s7 + $0x48] sm:$0xf]
    %v665 = vld [vmem:[%s7 + $0x4c] sm:$0xf]
    %v666 = vld [vmem:[%s7 + $0x50] sm:$0xf]
    %v667 = vld [vmem:[%s7 + $0x54] sm:$0xf]
    %v668 = vld [vmem:[%s7 + $0x58] sm:$0xf]
    %v669 = vld [vmem:[%s7 + $0x5c] sm:$0xf]
    %v670 = vld [vmem:[%s7 + $0x60] sm:$0xf]
    %v671 = vld [vmem:[%s7 + $0x64] sm:$0xf]
    %v672 = vld [vmem:[%s7 + $0x68] sm:$0xf]
    %v673 = vld [vmem:[%s7 + $0x6c] sm:$0xf]
    %v674 = vld [vmem:[%s7 + $0x70] sm:$0xf]
    %v675 = vld [vmem:[%s7 + $0x74] sm:$0xf]
    %v676 = vld [vmem:[%s7 + $0x78] sm:$0xf]
    %v677 = vld [vmem:[%s7 + $0x7c] sm:$0xf]
    %v678 = vld [vmem:[%s8] sm:$0x1]
    %v680 = vlaneseq
    %v681 = vshrl.u32 %v680, 7
    %v682 = vsub.s32 0, %v681
    %v683 = vrot.slane %v678, %v682
    %v717 = vunpack.c.l.b16 %v646
    %v718 = vunpack.c.l.b16 %v647
    %v719 = vunpack.c.l.b16 %v648
    %v720 = vunpack.c.l.b16 %v649
    %v721 = vunpack.c.l.b16 %v650
    %v722 = vunpack.c.l.b16 %v651
    %v723 = vunpack.c.l.b16 %v652
    %v724 = vunpack.c.l.b16 %v653
    %v725 = vunpack.c.l.b16 %v654
    %v726 = vunpack.c.l.b16 %v655
    %v727 = vunpack.c.l.b16 %v656
    %v728 = vunpack.c.l.b16 %v657
    %v729 = vunpack.c.l.b16 %v658
    %v730 = vunpack.c.l.b16 %v659
    %v731 = vunpack.c.l.b16 %v660
    %v732 = vunpack.c.l.b16 %v661
    %v733 = vunpack.c.l.b16 %v662
    %v734 = vunpack.c.l.b16 %v663
    %v735 = vunpack.c.l.b16 %v664
    %v736 = vunpack.c.l.b16 %v665
    %v737 = vunpack.c.l.b16 %v666
    %v738 = vunpack.c.l.b16 %v667
    %v739 = vunpack.c.l.b16 %v668
    %v740 = vunpack.c.l.b16 %v669
    %v741 = vunpack.c.l.b16 %v670
    %v742 = vunpack.c.l.b16 %v671
    %v743 = vunpack.c.l.b16 %v672
    %v744 = vunpack.c.l.b16 %v673
    %v745 = vunpack.c.l.b16 %v674
    %v746 = vunpack.c.l.b16 %v675
    %v747 = vunpack.c.l.b16 %v676
    %v748 = vunpack.c.l.b16 %v677
    %v749 = vpack.c.b16 %v718, %v717
    %v750 = vpack.c.b16 %v720, %v719
    %v751 = vpack.c.b16 %v722, %v721
    %v752 = vpack.c.b16 %v724, %v723
    %v753 = vpack.c.b16 %v726, %v725
    %v754 = vpack.c.b16 %v728, %v727
    %v755 = vpack.c.b16 %v730, %v729
    %v756 = vpack.c.b16 %v732, %v731
    %v757 = vpack.c.b16 %v734, %v733
    %v758 = vpack.c.b16 %v736, %v735
    %v759 = vpack.c.b16 %v738, %v737
    %v760 = vpack.c.b16 %v740, %v739
    %v761 = vpack.c.b16 %v742, %v741
    %v762 = vpack.c.b16 %v744, %v743
    %v763 = vpack.c.b16 %v746, %v745
    %v764 = vpack.c.b16 %v748, %v747
    %781 = vmatprep.subr.bf16.mxu0 0
    %782 = vmatpush1.bf16.msra.mxu0 %v749
    %783 = vmatprep.subr.bf16.mxu0 0
    %784 = vmatpush1.bf16.msra.mxu0 %v750
    %785 = vmatprep.subr.bf16.mxu0 0
    %786 = vmatpush1.bf16.msra.mxu0 %v751
    %787 = vmatprep.subr.bf16.mxu0 0
    %788 = vmatpush1.bf16.msra.mxu0 %v752
    %789 = vmatprep.subr.bf16.mxu0 0
    %790 = vmatpush1.bf16.msra.mxu0 %v753
    %791 = vmatprep.subr.bf16.mxu0 0
    %792 = vmatpush1.bf16.msra.mxu0 %v754
    %793 = vmatprep.subr.bf16.mxu0 0
    %794 = vmatpush1.bf16.msra.mxu0 %v755
    %795 = vmatprep.subr.bf16.mxu0 0
    %796 = vmatpush1.bf16.msra.mxu0 %v756
    %797 = vmatprep.subr.bf16.mxu0 0
    %798 = vmatpush1.bf16.msra.mxu0 %v757
    %799 = vmatprep.subr.bf16.mxu0 0
    %800 = vmatpush1.bf16.msra.mxu0 %v758
    %801 = vmatprep.subr.bf16.mxu0 0
    %802 = vmatpush1.bf16.msra.mxu0 %v759
    %803 = vmatprep.subr.bf16.mxu0 0
    %804 = vmatpush1.bf16.msra.mxu0 %v760
    %805 = vmatprep.subr.bf16.mxu0 0
    %806 = vmatpush1.bf16.msra.mxu0 %v761
    %807 = vmatprep.subr.bf16.mxu0 0
    %808 = vmatpush1.bf16.msra.mxu0 %v762
    %809 = vmatprep.subr.bf16.mxu0 0
    %810 = vmatpush1.bf16.msra.mxu0 %v763
    %811 = vmatprep.subr.bf16.mxu0 0
    %812 = vmatpush1.bf16.msra.mxu0 %v764
    %813 = vmatprep.mubr.bf16.mxu0 %v645
    %814 = vmatmul.mubr.bf16.gmra.mrb[0].mxu0 %v644
    %v815 = vpop.f32.mrb[0].mxu0
    %v816 = vadd.f32 %v683, %v815
    %v817 = vpop.f32.mrb[0].mxu0
    %v818 = vpop.f32.mrb[0].mxu0
    %v819 = vpop.f32.mrb[0].mxu0
    %820 = vdwg.mxu0
    %v821 = vmul.f32 %v816, 0.2
    %v822 = vmax.f32 %v816, %v821
    %v823 = vpack.c.bf16 %v822, %v822
    %v824 = vld [vmem:[%s9] sm:$0xf]
    %v825 = vld [vmem:[%s9 + $0x4] sm:$0xf]
    %v826 = vld [vmem:[%s9 + $0x8] sm:$0xf]
    %v827 = vld [vmem:[%s9 + $0xc] sm:$0xf]
    %v828 = vld [vmem:[%s9 + $0x10] sm:$0xf]
    %v829 = vld [vmem:[%s9 + $0x14] sm:$0xf]
    %v830 = vld [vmem:[%s9 + $0x18] sm:$0xf]
    %v831 = vld [vmem:[%s9 + $0x1c] sm:$0xf]
    %v832 = vld [vmem:[%s9 + $0x20] sm:$0xf]
    %v833 = vld [vmem:[%s9 + $0x24] sm:$0xf]
    %v834 = vld [vmem:[%s9 + $0x28] sm:$0xf]
    %v835 = vld [vmem:[%s9 + $0x2c] sm:$0xf]
    %v836 = vld [vmem:[%s9 + $0x30] sm:$0xf]
    %v837 = vld [vmem:[%s9 + $0x34] sm:$0xf]
    %v838 = vld [vmem:[%s9 + $0x38] sm:$0xf]
    %v839 = vld [vmem:[%s9 + $0x3c] sm:$0xf]
    %v840 = vld [vmem:[%s10] sm:$0x1]
    %v842 = vlaneseq
    %v843 = vshrl.u32 %v842, 7
    %v844 = vsub.s32 0, %v843
    %v845 = vrot.slane %v840, %v844
    %v863 = vunpack.c.l.b16 %v824
    %v864 = vunpack.c.l.b16 %v825
    %v865 = vunpack.c.l.b16 %v826
    %v866 = vunpack.c.l.b16 %v827
    %v867 = vunpack.c.l.b16 %v828
    %v868 = vunpack.c.l.b16 %v829
    %v869 = vunpack.c.l.b16 %v830
    %v870 = vunpack.c.l.b16 %v831
    %v871 = vunpack.c.l.b16 %v832
    %v872 = vunpack.c.l.b16 %v833
    %v873 = vunpack.c.l.b16 %v834
    %v874 = vunpack.c.l.b16 %v835
    %v875 = vunpack.c.l.b16 %v836
    %v876 = vunpack.c.l.b16 %v837
    %v877 = vunpack.c.l.b16 %v838
    %v878 = vunpack.c.l.b16 %v839
    %v879 = vpack.c.b16 %v864, %v863
    %v880 = vpack.c.b16 %v866, %v865
    %v881 = vpack.c.b16 %v868, %v867
    %v882 = vpack.c.b16 %v870, %v869
    %v883 = vpack.c.b16 %v872, %v871
    %v884 = vpack.c.b16 %v874, %v873
    %v885 = vpack.c.b16 %v876, %v875
    %v886 = vpack.c.b16 %v878, %v877
    %895 = vmatprep.subr.bf16.mxu0 0
    %896 = vmatpush1.bf16.msra.mxu0 %v879
    %897 = vmatprep.subr.bf16.mxu0 0
    %898 = vmatpush1.bf16.msra.mxu0 %v880
    %899 = vmatprep.subr.bf16.mxu0 0
    %900 = vmatpush1.bf16.msra.mxu0 %v881
    %901 = vmatprep.subr.bf16.mxu0 0
    %902 = vmatpush1.bf16.msra.mxu0 %v882
    %903 = vmatprep.subr.bf16.mxu0 0
    %904 = vmatpush1.bf16.msra.mxu0 %v883
    %905 = vmatprep.subr.bf16.mxu0 0
    %906 = vmatpush1.bf16.msra.mxu0 %v884
    %907 = vmatprep.subr.bf16.mxu0 0
    %908 = vmatpush1.bf16.msra.mxu0 %v885
    %909 = vmatprep.subr.bf16.mxu0 0
    %910 = vmatpush1.bf16.msra.mxu0 %v886
    %911 = vmatprep.subr.bf16.mxu0 0
    %912 = vmatpush1.bf16.msra.mxu0 0
    %913 = vmatprep.subr.bf16.mxu0 0
    %914 = vmatpush1.bf16.msra.mxu0 0
    %915 = vmatprep.subr.bf16.mxu0 0
    %916 = vmatpush1.bf16.msra.mxu0 0
    %917 = vmatprep.subr.bf16.mxu0 0
    %918 = vmatpush1.bf16.msra.mxu0 0
    %919 = vmatprep.subr.bf16.mxu0 0
    %920 = vmatpush1.bf16.msra.mxu0 0
    %921 = vmatprep.subr.bf16.mxu0 0
    %922 = vmatpush1.bf16.msra.mxu0 0
    %923 = vmatprep.subr.bf16.mxu0 0
    %924 = vmatpush1.bf16.msra.mxu0 0
    %925 = vmatprep.subr.bf16.mxu0 0
    %926 = vmatpush1.bf16.msra.mxu0 0
    %927 = vmatprep.mubr.bf16.mxu0 0
    %928 = vmatmul.mubr.bf16.gmra.mrb[0].mxu0 %v823
    %v929 = vpop.f32.mrb[0].mxu0
    %v930 = vadd.f32 %v845, %v929
    %v931 = vpop.f32.mrb[0].mxu0
    %v932 = vpop.f32.mrb[0].mxu0
    %v933 = vpop.f32.mrb[0].mxu0
    %934 = vdwg.mxu0
    %v935 = vmul.f32 %v930, 0.2
    %v936 = vmax.f32 %v930, %v935
    %v937 = vld [vmem:[%s11] sm:$0x1]
    %v939 = vlaneseq
    %v940 = vshrl.u32 %v939, 7
    %v941 = vsub.s32 0, %v940
    %v942 = vrot.slane %v937, %v941
    %v944 = vmul.f32 %v936, %v942
    %vm945 = vcmask 523264
    %v946 = vsel %vm945, %v944, 0.0
    %947 = vadd.xlane.f32.xlu0 %v946
    %v948 = vpop.xlane.xlu0 %947
    %s949 = sld [smem:[#allocation2]]
    %v950 = vstv %s949
    %v951 = vadd.f32 %v948, %v950
    %v952 = vsub.f32 0.0, %v951
    %v953 = vmul.f32 %v952, 1.442695
    %v954 = vpow.pop %v953
    %v955 = vadd.f32 %v954, 1.0
    %v956 = vrcp.pop %v955
    %vm957 = vcmask 7168
    %958 = vst.msk [vmem:[%s13] sm:$0xff] %vm957, %v956
    // Predicated region
    $region70: #{tpu_custom_call.1} parent=1 // pred_check
      _
    $region71: #{tpu_custom_call.1} parent=1 // pred_check_branch
      %960 = sbr.rel (0) target = $region73
    $region72: #{tpu_custom_call.1} parent=1 // pred_region
      _
    $region73: #{tpu_custom_call.1} parent=1 // pred_fallthru
      _
    // Predicated region
    $region74: #{tpu_custom_call.1} parent=1 // pred_check
      _
    $region75: #{tpu_custom_call.1} parent=1 // pred_check_branch
      %962 = sbr.rel (0) target = $region77
    $region76: #{tpu_custom_call.1} parent=1 // pred_region
      _
    $region77: #{tpu_custom_call.1} parent=1 // pred_fallthru
      _
    %963 = vsyncpa [#allocation4], 1
    %964 = vsyncpa [#allocation6], 1
    %965 = vsyncpa [#allocation9], 1

</llo_original>
